<compile_context>
chip_gen: v7x
topology: tpu7x:2x2x1
jax: 0.10.0
libtpu: 0.0.40
codegen_flags: <defaults>
</compile_context>

<pallas_src>
import functools

import jax
import jax.numpy as jnp
from jax.experimental import pallas as pl
from jax.experimental.pallas import tpu as pltpu

ALPHA = 1.0
GAMMA = 2.0   # module default; hard-wired as a square below
EPS = 1e-7


def _focal_loss_kernel(x_ref, t_ref, out_ref, *, n_rows, tile_rows):
    i = pl.program_id(0)

    # Zero the resident accumulator on the first grid step.
    @pl.when(i == 0)
    def _():
        out_ref[...] = jnp.zeros_like(out_ref)

    x = x_ref[...].astype(jnp.float32)        # (TN, C) logits tile
    t = t_ref[...]                            # (TN, 1) int32 targets tile
    tn, c = x.shape

    # Stable log-sum-exp along the class (lane) axis.
    m = jnp.max(x, axis=1, keepdims=True)                       # (TN, 1)
    shifted = x - m
    denom = jnp.sum(jnp.exp(shifted), axis=1, keepdims=True)    # (TN, 1)
    log_denom = jnp.log(denom)                                  # (TN, 1)

    # Gather the target-class shifted logit via a lane-iota compare.
    cls_idx = jax.lax.broadcasted_iota(jnp.int32, (tn, c), 1)
    onehot = (cls_idx == t).astype(jnp.float32)                 # (TN, C)
    x_t = jnp.sum(shifted * onehot, axis=1, keepdims=True)      # (TN, 1)

    # Cross entropy and clamped target probability (no full softmax needed).
    ce = log_denom - x_t                                        # (TN, 1)
    p_t = jnp.clip(jnp.exp(-ce), EPS, 1.0 - EPS)                # (TN, 1)
    one_minus = 1.0 - p_t
    loss = ALPHA * ce * (one_minus * one_minus)                 # gamma == 2

    # Mask rows that fall past the true batch size.  Static check: only emit
    # the mask when the last tile is partially out of bounds.
    if n_rows % tile_rows != 0:
        row_idx = i * tile_rows + jax.lax.broadcasted_iota(jnp.int32, (tn, 1), 0)
        loss = jnp.where(row_idx < n_rows, loss, 0.0)

    out_ref[...] += jnp.sum(loss, axis=0, keepdims=True)        # (1, 1)

    # Finalize: divide the accumulated sum by the true N (mean reduction).
    @pl.when(i == pl.num_programs(0) - 1)
    def _():
        out_ref[...] = out_ref[...] * jnp.float32(1.0 / n_rows)


def _choose_tile_rows(n, c, itemsize):
    """Largest multiple-of-8 row tile keeping 2x (double-buffered) logits <= 16 MiB."""
    budget = 16 << 20                      # conservative: fits v5e/v6e/v7x scoped VMEM
    max_rows = max(8, budget // (2 * max(c, 1) * itemsize))
    tn = min(1024, max_rows)
    tn = max(8, (tn // 8) * 8)
    n_pad = ((n + 7) // 8) * 8
    return min(tn, n_pad)


def focal_loss(logits, targets, *, tile_rows=None):
    """logits: (N, C) float, targets: (N,) int. Returns scalar f32 mean focal loss."""
    n, c = logits.shape
    t2d = targets.reshape(n, 1).astype(jnp.int32)
    if tile_rows is None:
        tile_rows = _choose_tile_rows(n, c, jnp.dtype(logits.dtype).itemsize)
    grid = (pl.cdiv(n, tile_rows),)

    kernel = functools.partial(_focal_loss_kernel, n_rows=n, tile_rows=tile_rows)

    out = pl.pallas_call(
        kernel,
        out_shape=jax.ShapeDtypeStruct((1, 1), jnp.float32),
        grid_spec=pltpu.PrefetchScalarGridSpec(
            num_scalar_prefetch=0,
            grid=grid,
            in_specs=[
                pl.BlockSpec((tile_rows, c), lambda i: (i, 0)),
                pl.BlockSpec((tile_rows, 1), lambda i: (i, 0)),
            ],
            out_specs=pl.BlockSpec((1, 1), lambda i: (0, 0)),
        ),
        compiler_params=pltpu.CompilerParams(
            dimension_semantics=("arbitrary",),
            vmem_limit_bytes=32 * 1024 * 1024,
        ),
    )(logits, t2d)
    return out[0, 0]


def _focal_loss_ref(logits, targets):
    """Pure-JAX reference mirroring the PyTorch module."""
    log_p = jax.nn.log_softmax(logits, axis=1)
    p = jnp.clip(jax.nn.softmax(logits, axis=1), EPS, 1.0 - EPS)
    ce = -jnp.take_along_axis(log_p, targets[:, None], axis=1)[:, 0]
    p_t = jnp.take_along_axis(p, targets[:, None], axis=1)[:, 0]
    loss = ALPHA * ce * (1.0 - p_t) ** GAMMA
    return jnp.mean(loss)


if __name__ == "__main__":
    key = jax.random.PRNGKey(0)
    k1, k2, k3, k4 = jax.random.split(key, 4)

    # Small test consistent with the module: batch=8, classes=32.
    N, C = 8, 32
    logits = jax.random.normal(k1, (N, C), dtype=jnp.float32)
    targets = jax.random.randint(k2, (N,), 0, C, dtype=jnp.int32)

    result = focal_loss(logits, targets)
    jax.block_until_ready(result)
    ref = _focal_loss_ref(logits, targets)
    assert jnp.allclose(result, ref, rtol=1e-5, atol=1e-6), (result, ref)

    # Ragged case: N not a multiple of the tile -> exercises grid accumulation
    # and padded-row masking (grid=(3,), last tile partially out of bounds).
    N2, C2 = 20, 32
    logits2 = jax.random.normal(k3, (N2, C2), dtype=jnp.float32)
    targets2 = jax.random.randint(k4, (N2,), 0, C2, dtype=jnp.int32)

    result2 = focal_loss(logits2, targets2, tile_rows=8)
    jax.block_until_ready(result2)
    ref2 = _focal_loss_ref(logits2, targets2)
    assert jnp.allclose(result2, ref2, rtol=1e-5, atol=1e-6), (result2, ref2)

    print("KERNEL_OK")
</pallas_src>

<mosaic_0001>
module attributes {stable_mosaic.version = 11 : i64} {
  func.func @_focal_loss_kernel(%arg0: i32, %arg1: memref<8x32xf32, #tpu.memory_space<vmem>>, %arg2: memref<8x1xi32, #tpu.memory_space<vmem>>, %arg3: memref<1x1xf32, #tpu.memory_space<vmem>>) attributes {dimension_semantics = [#tpu.dimension_semantics<arbitrary>], iteration_bounds = array<i64: 1>, scalar_prefetch = 0 : i64, scratch_operands = 0 : i64, tpu.core_type = #tpu.core_type<tc>, window_params = [{transform_indices = @transform_0, window_bounds = array<i64: 8, 32>}, {transform_indices = @transform_1, window_bounds = array<i64: 8, 1>}, {pipeline_mode = #tpu.pipeline_mode<synchronous>, transform_indices = @transform_2, window_bounds = array<i64: 1, 1>}]} {
    %c0_i32 = arith.constant 0 : i32
    %0 = arith.cmpi eq, %arg0, %c0_i32 : i32
    %1 = arith.extui %0 : i1 to i32
    %c0_i32_0 = arith.constant 0 : i32
    %2 = arith.cmpi ne, %1, %c0_i32_0 : i32
    scf.if %2 {
      %cst_18 = arith.constant 0.000000e+00 : f32
      %43 = vector.broadcast %cst_18 : f32 to vector<1x1xf32>
      %c0_19 = arith.constant 0 : index
      %c0_20 = arith.constant 0 : index
      %44 = vector.load %arg3[%c0_19, %c0_20] : memref<1x1xf32, #tpu.memory_space<vmem>>, vector<1x1xf32>
      tpu.vector_store %arg3[%c0_19, %c0_20], %43 {strides = array<i32>} : memref<1x1xf32, #tpu.memory_space<vmem>>, vector<1x1xf32>,
    } else {
    }
    %c0 = arith.constant 0 : index
    %c0_1 = arith.constant 0 : index
    %3 = vector.load %arg1[%c0, %c0_1] : memref<8x32xf32, #tpu.memory_space<vmem>>, vector<8x32xf32>
    %c0_2 = arith.constant 0 : index
    %c0_3 = arith.constant 0 : index
    %4 = vector.load %arg2[%c0_2, %c0_3] : memref<8x1xi32, #tpu.memory_space<vmem>>, vector<8x1xi32>
    %cst = arith.constant dense<0xFF800000> : vector<8xf32>
    %5 = vector.multi_reduction <maximumf>, %3, %cst [1] : vector<8x32xf32> to vector<8xf32>
    %6 = vector.shape_cast %5 : vector<8xf32> to vector<8x1xf32>
    %7 = vector.broadcast %6 : vector<8x1xf32> to vector<8x32xf32>
    %8 = arith.subf %3, %7 : vector<8x32xf32>
    %9 = math.exp %8 : vector<8x32xf32>
    %cst_4 = arith.constant dense<0.000000e+00> : vector<8xf32>
    %10 = vector.multi_reduction <add>, %9, %cst_4 [1] : vector<8x32xf32> to vector<8xf32>
    %11 = vector.shape_cast %10 : vector<8xf32> to vector<8x1xf32>
    %12 = math.log %11 : vector<8x1xf32>
    %13 = tpu.iota {dimensions = array<i32: 1>} : vector<8x32xi32>
    %14 = vector.broadcast %4 : vector<8x1xi32> to vector<8x32xi32>
    %15 = arith.cmpi eq, %13, %14 : vector<8x32xi32>
    %16 = arith.extui %15 : vector<8x32xi1> to vector<8x32xi32>
    %17 = arith.sitofp %16 : vector<8x32xi32> to vector<8x32xf32>
    %18 = arith.mulf %8, %17 : vector<8x32xf32>
    %cst_5 = arith.constant dense<0.000000e+00> : vector<8xf32>
    %19 = vector.multi_reduction <add>, %18, %cst_5 [1] : vector<8x32xf32> to vector<8xf32>
    %20 = vector.shape_cast %19 : vector<8xf32> to vector<8x1xf32>
    %21 = arith.subf %12, %20 : vector<8x1xf32>
    %cst_6 = arith.constant 0.000000e+00 : f32
    %22 = vector.broadcast %cst_6 : f32 to vector<8x1xf32>
    %23 = arith.subf %22, %21 : vector<8x1xf32>
    %24 = math.exp %23 : vector<8x1xf32>
    %cst_7 = arith.constant 1.000000e-07 : f32
    %cst_8 = arith.constant 0.99999988 : f32
    %25 = vector.broadcast %cst_7 : f32 to vector<8x1xf32>
    %26 = arith.maximumf %25, %24 : vector<8x1xf32>
    %27 = vector.broadcast %cst_8 : f32 to vector<8x1xf32>
    %28 = arith.minimumf %27, %26 : vector<8x1xf32>
    %cst_9 = arith.constant 1.000000e+00 : f32
    %29 = vector.broadcast %cst_9 : f32 to vector<8x1xf32>
    %30 = arith.subf %29, %28 : vector<8x1xf32>
    %cst_10 = arith.constant 1.000000e+00 : f32
    %31 = vector.broadcast %cst_10 : f32 to vector<8x1xf32>
    %32 = arith.mulf %31, %21 : vector<8x1xf32>
    %33 = arith.mulf %30, %30 : vector<8x1xf32>
    %34 = arith.mulf %32, %33 : vector<8x1xf32>
    %c0_11 = arith.constant 0 : index
    %c0_12 = arith.constant 0 : index
    %35 = vector.load %arg3[%c0_11, %c0_12] : memref<1x1xf32, #tpu.memory_space<vmem>>, vector<1x1xf32>
    %cst_13 = arith.constant dense<0.000000e+00> : vector<1xf32>
    %36 = vector.multi_reduction <add>, %34, %cst_13 [0] : vector<8x1xf32> to vector<1xf32>
    %37 = vector.shape_cast %36 : vector<1xf32> to vector<1x1xf32>
    %38 = arith.addf %35, %37 : vector<1x1xf32>
    %c0_14 = arith.constant 0 : index
    %c0_15 = arith.constant 0 : index
    %39 = vector.load %arg3[%c0_14, %c0_15] : memref<1x1xf32, #tpu.memory_space<vmem>>, vector<1x1xf32>
    tpu.vector_store %arg3[%c0_14, %c0_15], %38 {strides = array<i32>} : memref<1x1xf32, #tpu.memory_space<vmem>>, vector<1x1xf32>,
    %c0_i32_16 = arith.constant 0 : i32
    %40 = arith.cmpi eq, %arg0, %c0_i32_16 : i32
    %41 = arith.extui %40 : i1 to i32
    %c0_i32_17 = arith.constant 0 : i32
    %42 = arith.cmpi ne, %41, %c0_i32_17 : i32
    scf.if %42 {
      %c0_18 = arith.constant 0 : index
      %c0_19 = arith.constant 0 : index
      %43 = vector.load %arg3[%c0_18, %c0_19] : memref<1x1xf32, #tpu.memory_space<vmem>>, vector<1x1xf32>
      %cst_20 = arith.constant 1.250000e-01 : f32
      %44 = vector.broadcast %cst_20 : f32 to vector<1x1xf32>
      %45 = arith.mulf %43, %44 : vector<1x1xf32>
      %c0_21 = arith.constant 0 : index
      %c0_22 = arith.constant 0 : index
      %46 = vector.load %arg3[%c0_21, %c0_22] : memref<1x1xf32, #tpu.memory_space<vmem>>, vector<1x1xf32>
      tpu.vector_store %arg3[%c0_21, %c0_22], %45 {strides = array<i32>} : memref<1x1xf32, #tpu.memory_space<vmem>>, vector<1x1xf32>,
    } else {
    }
    return
  }
  func.func @transform_0(%arg0: i32) -> (i32, i32) {
    %c0_i32 = arith.constant 0 : i32
    %c0_i32_0 = arith.constant 0 : i32
    return %arg0, %c0_i32 : i32, i32
  }
  func.func @transform_1(%arg0: i32) -> (i32, i32) {
    %c0_i32 = arith.constant 0 : i32
    %c0_i32_0 = arith.constant 0 : i32
    return %arg0, %c0_i32 : i32, i32
  }
  func.func @transform_2(%arg0: i32) -> (i32, i32) {
    %c0_i32 = arith.constant 0 : i32
    %c0_i32_0 = arith.constant 0 : i32
    %c0_i32_1 = arith.constant 0 : i32
    return %c0_i32, %c0_i32_0 : i32, i32
  }
}

</mosaic_0001>

<llo_original>
// kernel: tpu_custom_call.1
$region0: #{tpu_custom_call.1}
  #allocation0 [shape = 'u32[]', space=smem, size = 0x4, offset = 0x4, fixed_abs, tag = 'smem constant byte address 0x4 - core index']
  #allocation1 [shape = 'u32[144,128]{1,0:T(1,128)}', space=vmem, size = 0x12000, scoped, tag = 'internal scratch']
  %s0 = inlined_call_operand.vmem [shape: f32[8,32], index: 0, kind: input, shape index: {}]
  %s1 = inlined_call_operand.vmem [shape: s32[8,1], index: 1, kind: input, shape index: {}]
  %s2 = inlined_call_operand.hbm [shape: f32[1,1], index: 2, kind: output, shape index: {}]
  %s3 = sld [smem:[#allocation0]]
  $region26: #{tpu_custom_call.1} parent=0
    _
  %s5 = ssub.s32 1, %s3
  %s6 = scalar_select 0, %s5, %s3
  $region1: #{tpu_custom_call.1} parent=0
    #allocation2 [shape = 'u8[512]{0}', space=vmem, size = 0x400, scoped, tag = 'output window, operand 0, single buffered']
    #allocation3 [shape = 's32[1]{0}', space=sflag, size = 0x4, scoped, tag = 'scoped memory for tpu_custom_call.1']
    %7 = vsyncpa [#allocation3], 0
    // Predicated region
    $region2: #{tpu_custom_call.1} parent=1 // pred_check
      _
    $region3: #{tpu_custom_call.1} parent=1 // pred_check_branch
      %9 = sbr.rel (0) target = $region5
    $region4: #{tpu_custom_call.1} parent=1 // pred_region
      _
    $region5: #{tpu_custom_call.1} parent=1 // pred_fallthru
      _
    // Predicated region
    $region6: #{tpu_custom_call.1} parent=1 // pred_check
      _
    $region7: #{tpu_custom_call.1} parent=1 // pred_check_branch
      %11 = sbr.rel (0) target = $region9
    $region8: #{tpu_custom_call.1} parent=1 // pred_region
      _
    $region9: #{tpu_custom_call.1} parent=1 // pred_fallthru
      _
    %p12 = scmp.eq.s32.totalorder 0, 0
    // Predicated region
    $region10: #{tpu_custom_call.1} parent=1 // pred_check
      %p13 = pneg %p12
    $region11: #{tpu_custom_call.1} parent=1 // pred_check_branch
      %15 = sbr.rel (%p13) target = $region13
    $region12: #{tpu_custom_call.1} parent=1 // pred_region
      %vm16 = vcmask 0
      %17 = vst.msk [vmem:[#allocation2] sm:$0x1] %vm16, 0.0
    $region13: #{tpu_custom_call.1} parent=1 // pred_fallthru
      _
    %v18 = vld [vmem:[%s0] sm:$0xff]
    %v19 = vld [vmem:[%s1] sm:$0xff]
    %vm20 = vcmask 261120
    %v21 = vsel %vm20, %v18, -inf
    %22 = vmax.xlane.f32.xlu0 %v21
    %v23 = vpop.xlane.xlu0 %22
    %v24 = vsub.f32 %v18, %v23
    %v25 = vmul.f32 %v24, 1.442695
    %v26 = vpow.pop %v25
    %v27 = vsel %vm20, %v26, 0.0
    %28 = vadd.xlane.f32.xlu0 %v27
    %v29 = vpop.xlane.xlu0 %28
    %v30 = vlog2.pop %v29
    %v31 = vmul.f32 %v30, 0.6931472
    %v32 = vlaneseq
    %v33 = vand.u32 %v32, 127
    %34 = vset.pattern.permute.xlu0 0
    %35 = vperm.xlu0 %34, %v19
    %v36 = vpop.permute.xlu0 %35
    %vm37 = vcmp.eq.s32.totalorder %v33, %v36
    %v38 = vsel %vm37, 1, 0
    %v39 = vcvt.s32.f32 %v38
    %v40 = vmul.f32 %v24, %v39
    %v41 = vsel %vm20, %v40, 0.0
    %42 = vadd.xlane.f32.xlu0 %v41
    %v43 = vpop.xlane.xlu0 %42
    %v44 = vsub.f32 %v31, %v43
    %v45 = vsub.f32 0.0, %v44
    %v46 = vmul.f32 %v45, 1.442695
    %v47 = vpow.pop %v46
    %v48 = vmax.f32 %v47, 1e-07
    %v49 = vmin.f32 %v48, 0.9999999
    %v50 = vsub.f32 1.0, %v49
    %v51 = vmul.f32 %v50, %v50
    %v52 = vmul.f32 %v44, %v51
    %v53 = vld [vmem:[#allocation2] sm:$0x1]
    %v54 = vrot.slane %v52, 4
    %v55 = vadd.f32 %v52, %v54
    %v56 = vrot.slane %v55, 2
    %v57 = vadd.f32 %v55, %v56
    %v58 = vrot.slane %v57, 1
    %v59 = vadd.f32 %v57, %v58
    %v60 = vadd.f32 %v53, %v59
    %vm61 = vcmask 0
    %62 = vst.msk [vmem:[#allocation2] sm:$0x1] %vm61, %v60
    // Predicated region
    $region14: #{tpu_custom_call.1} parent=1 // pred_check
      %p63 = pneg %p12
    $region15: #{tpu_custom_call.1} parent=1 // pred_check_branch
      %65 = sbr.rel (%p63) target = $region17
    $region16: #{tpu_custom_call.1} parent=1 // pred_region
      %v66 = vld [vmem:[#allocation2] sm:$0x1]
      %v67 = vmul.f32 %v66, 0.125
      %68 = vst.msk [vmem:[#allocation2] sm:$0x1] %vm61, %v67
    $region17: #{tpu_custom_call.1} parent=1 // pred_fallthru
      _
    // Predicated region
    $region18: #{tpu_custom_call.1} parent=1 // pred_check
      _
    $region19: #{tpu_custom_call.1} parent=1 // pred_check_branch
      %70 = sbr.rel (0) target = $region21
    $region20: #{tpu_custom_call.1} parent=1 // pred_region
      %s72 = ssub.s32 16, 16
      %73 = vsyncadd [#allocation3], %s72
      %s75 = sshll.u32 [#allocation2], 4
      %s76 = int_to_ptr.vmem [resolvable:$true] %s75
      %78 = dma.vmem_to_hbm [thread:$0]  %s76, 16, %s2, [#allocation3]
    $region21: #{tpu_custom_call.1} parent=1 // pred_fallthru
      _
    // Predicated region
    $region22: #{tpu_custom_call.1} parent=1 // pred_check
      _
    $region23: #{tpu_custom_call.1} parent=1 // pred_check_branch
      %80 = sbr.rel (0) target = $region25
    $region24: #{tpu_custom_call.1} parent=1 // pred_region
      %81 = dma.done [#allocation3], 16
    $region25: #{tpu_custom_call.1} parent=1 // pred_fallthru
      _
    %82 = vsyncpa [#allocation3], 1

</llo_original>
